<compile_context>
chip_gen: v5e
topology: v5e:2x2
jax: 0.10.0
libtpu: 0.0.40
codegen_flags: <defaults>
</compile_context>

<pallas_src>
import functools

import numpy as np
import jax
import jax.numpy as jnp
from jax.experimental import pallas as pl
from jax.experimental.pallas import tpu as pltpu

# ---- model config (small shapes consistent with the module) ----
D_MODEL = 32
D_K = 16
D_V = 16
N_HEADS = 4
LN_EPS = 1e-5               # PyTorch nn.LayerNorm default
MASK_FILL = -1000000000.0   # masked_fill_ value in the reference


def _mha_kernel(inv_sqrt_dk, n_heads, d_k, d_v,
                xq_ref, xk_ref, xv_ref, mask_ref,
                wq_ref, wk_ref, wv_ref, wfc_ref, g_ref, b_ref,
                out_ref, attn_ref):
    """One batch element per grid step; everything stays VMEM-resident."""
    xq = xq_ref[...]          # (Sq, D) -- also the residual
    xk = xk_ref[...]          # (Sk, D)
    xv = xv_ref[...]          # (Sk, D)
    mask = mask_ref[...]      # (Sq, Sk) float32, 1.0 == masked

    # Q/K/V projections (MXU, intermediates stay in vregs/VMEM).
    q = jnp.dot(xq, wq_ref[...], preferred_element_type=jnp.float32)  # (Sq, H*dk)
    k = jnp.dot(xk, wk_ref[...], preferred_element_type=jnp.float32)  # (Sk, H*dk)
    v = jnp.dot(xv, wv_ref[...], preferred_element_type=jnp.float32)  # (Sk, H*dv)

    masked = mask > 0.5
    ctx_parts = []
    for h in range(n_heads):                   # static unroll (H=4)
        q_h = q[:, h * d_k:(h + 1) * d_k]      # (Sq, dk)
        k_h = k[:, h * d_k:(h + 1) * d_k]      # (Sk, dk)
        v_h = v[:, h * d_v:(h + 1) * d_v]      # (Sk, dv)
        scores = jnp.dot(q_h, k_h.T,
                         preferred_element_type=jnp.float32) * inv_sqrt_dk
        scores = jnp.where(masked, MASK_FILL, scores)
        smax = jnp.max(scores, axis=-1, keepdims=True)
        e = jnp.exp(scores - smax)
        denom = jnp.sum(e, axis=-1, keepdims=True)
        attn_h = e * pl.reciprocal(denom, approx=True)     # softmax(dim=-1)
        attn_ref[h] = attn_h
        ctx_parts.append(jnp.dot(attn_h, v_h,
                                 preferred_element_type=jnp.float32))
    ctx = jnp.concatenate(ctx_parts, axis=-1)              # (Sq, H*dv)

    out = jnp.dot(ctx, wfc_ref[...], preferred_element_type=jnp.float32)
    y = out + xq                                           # residual add
    mu = jnp.mean(y, axis=-1, keepdims=True)
    var = jnp.mean((y - mu) ** 2, axis=-1, keepdims=True)
    out_ref[...] = (y - mu) * jax.lax.rsqrt(var + LN_EPS) * g_ref[...] + b_ref[...]


def multi_head_attention(input_q, input_k, input_v, attn_mask, params):
    """input_q:(B,Sq,D) input_k/input_v:(B,Sk,D) attn_mask:(B,Sq,Sk) bool (True==masked).
    Returns (layernorm(fc(context) + input_q), attn) like the PyTorch module."""
    B, Sq, D = input_q.shape
    Sk = input_k.shape[1]
    H, dk, dv = N_HEADS, D_K, D_V

    # nn.Linear stores (out, in); the matmuls want (in, out).
    wq_t = params['wq'].T          # (D, H*dk)
    wk_t = params['wk'].T          # (D, H*dk)
    wv_t = params['wv'].T          # (D, H*dv)
    wfc_t = params['fc'].T         # (H*dv, D)
    gamma = params['ln_g'].reshape(1, D)
    beta = params['ln_b'].reshape(1, D)
    mask_f = attn_mask.astype(jnp.float32)   # (B, Sq, Sk); reused across heads

    kern = functools.partial(_mha_kernel, 1.0 / float(np.sqrt(dk)), H, dk, dv)
    out, attn = pl.pallas_call(
        kern,
        out_shape=(jax.ShapeDtypeStruct((B, Sq, D), jnp.float32),
                   jax.ShapeDtypeStruct((B, H, Sq, Sk), jnp.float32)),
        grid=(B,),
        in_specs=[
            pl.BlockSpec((None, Sq, D), lambda b: (b, 0, 0)),
            pl.BlockSpec((None, Sk, D), lambda b: (b, 0, 0)),
            pl.BlockSpec((None, Sk, D), lambda b: (b, 0, 0)),
            pl.BlockSpec((None, Sq, Sk), lambda b: (b, 0, 0)),
            pl.BlockSpec((D, H * dk), lambda b: (0, 0)),
            pl.BlockSpec((D, H * dk), lambda b: (0, 0)),
            pl.BlockSpec((D, H * dv), lambda b: (0, 0)),
            pl.BlockSpec((H * dv, D), lambda b: (0, 0)),
            pl.BlockSpec((1, D), lambda b: (0, 0)),
            pl.BlockSpec((1, D), lambda b: (0, 0)),
        ],
        out_specs=(pl.BlockSpec((None, Sq, D), lambda b: (b, 0, 0)),
                   pl.BlockSpec((None, H, Sq, Sk), lambda b: (b, 0, 0, 0))),
        compiler_params=pltpu.CompilerParams(
            dimension_semantics=("parallel",)),
    )(input_q, input_k, input_v, mask_f,
      wq_t, wk_t, wv_t, wfc_t, gamma, beta)
    return out, attn


def init_params(key):
    k1, k2, k3, k4 = jax.random.split(key, 4)
    s = 0.1
    return dict(
        wq=s * jax.random.normal(k1, (D_K * N_HEADS, D_MODEL), jnp.float32),
        wk=s * jax.random.normal(k2, (D_K * N_HEADS, D_MODEL), jnp.float32),
        wv=s * jax.random.normal(k3, (D_V * N_HEADS, D_MODEL), jnp.float32),
        fc=s * jax.random.normal(k4, (D_MODEL, N_HEADS * D_V), jnp.float32),
        ln_g=jnp.ones((D_MODEL,), jnp.float32),
        ln_b=jnp.zeros((D_MODEL,), jnp.float32))


if __name__ == "__main__":
    key = jax.random.PRNGKey(0)
    kp, kq, kk = jax.random.split(key, 3)
    params = init_params(kp)

    B, SQ, SK = 2, 8, 8
    input_q = jax.random.normal(kq, (B, SQ, D_MODEL), jnp.float32)
    input_k = jax.random.normal(kk, (B, SK, D_MODEL), jnp.float32)
    input_v = input_k  # same K/V source (typical usage)

    # padding attention mask: True == masked (key positions beyond valid length)
    valid_lens = jnp.array([5, 8], dtype=jnp.int32)
    key_pos = jnp.arange(SK, dtype=jnp.int32)[None, None, :]           # (1,1,Sk)
    attn_mask = jnp.broadcast_to(key_pos >= valid_lens[:, None, None],
                                 (B, SQ, SK))                          # (B,Sq,Sk) bool

    out, attn = multi_head_attention(input_q, input_k, input_v, attn_mask, params)
    jax.block_until_ready(out)
    jax.block_until_ready(attn)

    assert out.shape == (B, SQ, D_MODEL)
    assert attn.shape == (B, N_HEADS, SQ, SK)
    assert bool(jnp.all(jnp.isfinite(out)))
    assert bool(jnp.all(jnp.isfinite(attn)))
    # masked key columns get ~zero attention weight
    assert float(jnp.max(attn[0, :, :, 5:])) < 1e-6
    print("KERNEL_OK")
</pallas_src>

<mosaic_0001>
module attributes {stable_mosaic.version = 11 : i64} {
  func.func @_mha_kernel(%arg0: i32, %arg1: memref<1x8x32xf32, #tpu.memory_space<vmem>>, %arg2: memref<1x8x32xf32, #tpu.memory_space<vmem>>, %arg3: memref<1x8x32xf32, #tpu.memory_space<vmem>>, %arg4: memref<1x8x8xf32, #tpu.memory_space<vmem>>, %arg5: memref<32x64xf32, #tpu.memory_space<vmem>>, %arg6: memref<32x64xf32, #tpu.memory_space<vmem>>, %arg7: memref<32x64xf32, #tpu.memory_space<vmem>>, %arg8: memref<64x32xf32, #tpu.memory_space<vmem>>, %arg9: memref<1x32xf32, #tpu.memory_space<vmem>>, %arg10: memref<1x32xf32, #tpu.memory_space<vmem>>, %arg11: memref<1x8x32xf32, #tpu.memory_space<vmem>>, %arg12: memref<1x4x8x8xf32, #tpu.memory_space<vmem>>) attributes {dimension_semantics = [#tpu.dimension_semantics<parallel>], iteration_bounds = array<i64: 2>, scalar_prefetch = 0 : i64, scratch_operands = 0 : i64, tpu.core_type = #tpu.core_type<tc>, window_params = [{transform_indices = @transform_0, window_bounds = array<i64: 1, 8, 32>}, {transform_indices = @transform_1, window_bounds = array<i64: 1, 8, 32>}, {transform_indices = @transform_2, window_bounds = array<i64: 1, 8, 32>}, {transform_indices = @transform_3, window_bounds = array<i64: 1, 8, 8>}, {pipeline_mode = #tpu.pipeline_mode<synchronous>, transform_indices = @transform_4, window_bounds = array<i64: 32, 64>}, {pipeline_mode = #tpu.pipeline_mode<synchronous>, transform_indices = @transform_5, window_bounds = array<i64: 32, 64>}, {pipeline_mode = #tpu.pipeline_mode<synchronous>, transform_indices = @transform_6, window_bounds = array<i64: 32, 64>}, {pipeline_mode = #tpu.pipeline_mode<synchronous>, transform_indices = @transform_7, window_bounds = array<i64: 64, 32>}, {pipeline_mode = #tpu.pipeline_mode<synchronous>, transform_indices = @transform_8, window_bounds = array<i64: 1, 32>}, {pipeline_mode = #tpu.pipeline_mode<synchronous>, transform_indices = @transform_9, window_bounds = array<i64: 1, 32>}, {transform_indices = @transform_10, window_bounds = array<i64: 1, 8, 32>}, {transform_indices = @transform_11, window_bounds = array<i64: 1, 4, 8, 8>}]} {
    %c0 = arith.constant 0 : index
    %c0_0 = arith.constant 0 : index
    %c0_1 = arith.constant 0 : index
    %0 = vector.load %arg1[%c0, %c0_0, %c0_1] : memref<1x8x32xf32, #tpu.memory_space<vmem>>, vector<1x8x32xf32>
    %1 = vector.shape_cast %0 : vector<1x8x32xf32> to vector<8x32xf32>
    %c0_2 = arith.constant 0 : index
    %c0_3 = arith.constant 0 : index
    %c0_4 = arith.constant 0 : index
    %2 = vector.load %arg2[%c0_2, %c0_3, %c0_4] : memref<1x8x32xf32, #tpu.memory_space<vmem>>, vector<1x8x32xf32>
    %3 = vector.shape_cast %2 : vector<1x8x32xf32> to vector<8x32xf32>
    %c0_5 = arith.constant 0 : index
    %c0_6 = arith.constant 0 : index
    %c0_7 = arith.constant 0 : index
    %4 = vector.load %arg3[%c0_5, %c0_6, %c0_7] : memref<1x8x32xf32, #tpu.memory_space<vmem>>, vector<1x8x32xf32>
    %5 = vector.shape_cast %4 : vector<1x8x32xf32> to vector<8x32xf32>
    %c0_8 = arith.constant 0 : index
    %c0_9 = arith.constant 0 : index
    %c0_10 = arith.constant 0 : index
    %6 = vector.load %arg4[%c0_8, %c0_9, %c0_10] : memref<1x8x8xf32, #tpu.memory_space<vmem>>, vector<1x8x8xf32>
    %7 = vector.shape_cast %6 : vector<1x8x8xf32> to vector<8x8xf32>
    %c0_11 = arith.constant 0 : index
    %c0_12 = arith.constant 0 : index
    %8 = vector.load %arg5[%c0_11, %c0_12] : memref<32x64xf32, #tpu.memory_space<vmem>>, vector<32x64xf32>
    %cst = arith.constant dense<0.000000e+00> : vector<8x64xf32>
    %9 = tpu.matmul %1, %8, %cst {dimension_numbers = #tpu.dot_dimension_numbers<[1], [0], [0], [1], [0, 0, 1, 1], [], []>} : vector<8x32xf32>, vector<32x64xf32>, vector<8x64xf32> -> vector<8x64xf32>
    %c0_13 = arith.constant 0 : index
    %c0_14 = arith.constant 0 : index
    %10 = vector.load %arg6[%c0_13, %c0_14] : memref<32x64xf32, #tpu.memory_space<vmem>>, vector<32x64xf32>
    %cst_15 = arith.constant dense<0.000000e+00> : vector<8x64xf32>
    %11 = tpu.matmul %3, %10, %cst_15 {dimension_numbers = #tpu.dot_dimension_numbers<[1], [0], [0], [1], [0, 0, 1, 1], [], []>} : vector<8x32xf32>, vector<32x64xf32>, vector<8x64xf32> -> vector<8x64xf32>
    %c0_16 = arith.constant 0 : index
    %c0_17 = arith.constant 0 : index
    %12 = vector.load %arg7[%c0_16, %c0_17] : memref<32x64xf32, #tpu.memory_space<vmem>>, vector<32x64xf32>
    %cst_18 = arith.constant dense<0.000000e+00> : vector<8x64xf32>
    %13 = tpu.matmul %5, %12, %cst_18 {dimension_numbers = #tpu.dot_dimension_numbers<[1], [0], [0], [1], [0, 0, 1, 1], [], []>} : vector<8x32xf32>, vector<32x64xf32>, vector<8x64xf32> -> vector<8x64xf32>
    %cst_19 = arith.constant 5.000000e-01 : f32
    %14 = vector.broadcast %cst_19 : f32 to vector<8x8xf32>
    %15 = arith.cmpf ogt, %7, %14 : vector<8x8xf32>
    %16 = vector.extract_strided_slice %9 {offsets = [0, 0], sizes = [8, 16], strides = [1, 1]} : vector<8x64xf32> to vector<8x16xf32>
    %17 = vector.extract_strided_slice %11 {offsets = [0, 0], sizes = [8, 16], strides = [1, 1]} : vector<8x64xf32> to vector<8x16xf32>
    %18 = vector.extract_strided_slice %13 {offsets = [0, 0], sizes = [8, 16], strides = [1, 1]} : vector<8x64xf32> to vector<8x16xf32>
    %19 = tpu.transpose %17, [1, 0] : vector<8x16xf32> -> vector<16x8xf32>
    %cst_20 = arith.constant dense<0.000000e+00> : vector<8x8xf32>
    %20 = tpu.matmul %16, %19, %cst_20 {dimension_numbers = #tpu.dot_dimension_numbers<[1], [0], [0], [1], [0, 0, 1, 1], [], []>} : vector<8x16xf32>, vector<16x8xf32>, vector<8x8xf32> -> vector<8x8xf32>
    %cst_21 = arith.constant 2.500000e-01 : f32
    %21 = vector.broadcast %cst_21 : f32 to vector<8x8xf32>
    %22 = arith.mulf %20, %21 : vector<8x8xf32>
    %cst_22 = arith.constant -1.000000e+09 : f32
    %23 = vector.broadcast %cst_22 : f32 to vector<8x8xf32>
    %24 = arith.select %15, %23, %22 : vector<8x8xi1>, vector<8x8xf32>
    %cst_23 = arith.constant dense<0xFF800000> : vector<8xf32>
    %25 = vector.multi_reduction <maximumf>, %24, %cst_23 [1] : vector<8x8xf32> to vector<8xf32>
    %26 = vector.shape_cast %25 : vector<8xf32> to vector<8x1xf32>
    %27 = vector.broadcast %26 : vector<8x1xf32> to vector<8x8xf32>
    %28 = arith.subf %24, %27 : vector<8x8xf32>
    %29 = math.exp %28 : vector<8x8xf32>
    %cst_24 = arith.constant dense<0.000000e+00> : vector<8xf32>
    %30 = vector.multi_reduction <add>, %29, %cst_24 [1] : vector<8x8xf32> to vector<8xf32>
    %31 = vector.shape_cast %30 : vector<8xf32> to vector<8x1xf32>
    %32 = tpu.reciprocal %31 {approx = true} : vector<8x1xf32> -> vector<8x1xf32>
    %33 = vector.broadcast %32 : vector<8x1xf32> to vector<8x8xf32>
    %34 = arith.mulf %29, %33 : vector<8x8xf32>
    %c0_25 = arith.constant 0 : index
    %c0_26 = arith.constant 0 : index
    %c0_27 = arith.constant 0 : index
    %c0_28 = arith.constant 0 : index
    %35 = vector.load %arg12[%c0_25, %c0_26, %c0_27, %c0_28] : memref<1x4x8x8xf32, #tpu.memory_space<vmem>>, vector<1x1x8x8xf32>
    %36 = vector.shape_cast %35 : vector<1x1x8x8xf32> to vector<8x8xf32>
    %37 = vector.shape_cast %34 : vector<8x8xf32> to vector<1x1x8x8xf32>
    tpu.vector_store %arg12[%c0_25, %c0_26, %c0_27, %c0_28], %37 {strides = array<i32>} : memref<1x4x8x8xf32, #tpu.memory_space<vmem>>, vector<1x1x8x8xf32>,
    %cst_29 = arith.constant dense<0.000000e+00> : vector<8x16xf32>
    %38 = tpu.matmul %34, %18, %cst_29 {dimension_numbers = #tpu.dot_dimension_numbers<[1], [0], [0], [1], [0, 0, 1, 1], [], []>} : vector<8x8xf32>, vector<8x16xf32>, vector<8x16xf32> -> vector<8x16xf32>
    %39 = vector.extract_strided_slice %9 {offsets = [0, 16], sizes = [8, 16], strides = [1, 1]} : vector<8x64xf32> to vector<8x16xf32>
    %40 = vector.extract_strided_slice %11 {offsets = [0, 16], sizes = [8, 16], strides = [1, 1]} : vector<8x64xf32> to vector<8x16xf32>
    %41 = vector.extract_strided_slice %13 {offsets = [0, 16], sizes = [8, 16], strides = [1, 1]} : vector<8x64xf32> to vector<8x16xf32>
    %42 = tpu.transpose %40, [1, 0] : vector<8x16xf32> -> vector<16x8xf32>
    %cst_30 = arith.constant dense<0.000000e+00> : vector<8x8xf32>
    %43 = tpu.matmul %39, %42, %cst_30 {dimension_numbers = #tpu.dot_dimension_numbers<[1], [0], [0], [1], [0, 0, 1, 1], [], []>} : vector<8x16xf32>, vector<16x8xf32>, vector<8x8xf32> -> vector<8x8xf32>
    %cst_31 = arith.constant 2.500000e-01 : f32
    %44 = vector.broadcast %cst_31 : f32 to vector<8x8xf32>
    %45 = arith.mulf %43, %44 : vector<8x8xf32>
    %cst_32 = arith.constant -1.000000e+09 : f32
    %46 = vector.broadcast %cst_32 : f32 to vector<8x8xf32>
    %47 = arith.select %15, %46, %45 : vector<8x8xi1>, vector<8x8xf32>
    %cst_33 = arith.constant dense<0xFF800000> : vector<8xf32>
    %48 = vector.multi_reduction <maximumf>, %47, %cst_33 [1] : vector<8x8xf32> to vector<8xf32>
    %49 = vector.shape_cast %48 : vector<8xf32> to vector<8x1xf32>
    %50 = vector.broadcast %49 : vector<8x1xf32> to vector<8x8xf32>
    %51 = arith.subf %47, %50 : vector<8x8xf32>
    %52 = math.exp %51 : vector<8x8xf32>
    %cst_34 = arith.constant dense<0.000000e+00> : vector<8xf32>
    %53 = vector.multi_reduction <add>, %52, %cst_34 [1] : vector<8x8xf32> to vector<8xf32>
    %54 = vector.shape_cast %53 : vector<8xf32> to vector<8x1xf32>
    %55 = tpu.reciprocal %54 {approx = true} : vector<8x1xf32> -> vector<8x1xf32>
    %56 = vector.broadcast %55 : vector<8x1xf32> to vector<8x8xf32>
    %57 = arith.mulf %52, %56 : vector<8x8xf32>
    %c0_35 = arith.constant 0 : index
    %c1 = arith.constant 1 : index
    %c0_36 = arith.constant 0 : index
    %c0_37 = arith.constant 0 : index
    %58 = vector.load %arg12[%c0_35, %c1, %c0_36, %c0_37] : memref<1x4x8x8xf32, #tpu.memory_space<vmem>>, vector<1x1x8x8xf32>
    %59 = vector.shape_cast %58 : vector<1x1x8x8xf32> to vector<8x8xf32>
    %60 = vector.shape_cast %57 : vector<8x8xf32> to vector<1x1x8x8xf32>
    tpu.vector_store %arg12[%c0_35, %c1, %c0_36, %c0_37], %60 {strides = array<i32>} : memref<1x4x8x8xf32, #tpu.memory_space<vmem>>, vector<1x1x8x8xf32>,
    %cst_38 = arith.constant dense<0.000000e+00> : vector<8x16xf32>
    %61 = tpu.matmul %57, %41, %cst_38 {dimension_numbers = #tpu.dot_dimension_numbers<[1], [0], [0], [1], [0, 0, 1, 1], [], []>} : vector<8x8xf32>, vector<8x16xf32>, vector<8x16xf32> -> vector<8x16xf32>
    %62 = vector.extract_strided_slice %9 {offsets = [0, 32], sizes = [8, 16], strides = [1, 1]} : vector<8x64xf32> to vector<8x16xf32>
    %63 = vector.extract_strided_slice %11 {offsets = [0, 32], sizes = [8, 16], strides = [1, 1]} : vector<8x64xf32> to vector<8x16xf32>
    %64 = vector.extract_strided_slice %13 {offsets = [0, 32], sizes = [8, 16], strides = [1, 1]} : vector<8x64xf32> to vector<8x16xf32>
    %65 = tpu.transpose %63, [1, 0] : vector<8x16xf32> -> vector<16x8xf32>
    %cst_39 = arith.constant dense<0.000000e+00> : vector<8x8xf32>
    %66 = tpu.matmul %62, %65, %cst_39 {dimension_numbers = #tpu.dot_dimension_numbers<[1], [0], [0], [1], [0, 0, 1, 1], [], []>} : vector<8x16xf32>, vector<16x8xf32>, vector<8x8xf32> -> vector<8x8xf32>
    %cst_40 = arith.constant 2.500000e-01 : f32
    %67 = vector.broadcast %cst_40 : f32 to vector<8x8xf32>
    %68 = arith.mulf %66, %67 : vector<8x8xf32>
    %cst_41 = arith.constant -1.000000e+09 : f32
    %69 = vector.broadcast %cst_41 : f32 to vector<8x8xf32>
    %70 = arith.select %15, %69, %68 : vector<8x8xi1>, vector<8x8xf32>
    %cst_42 = arith.constant dense<0xFF800000> : vector<8xf32>
    %71 = vector.multi_reduction <maximumf>, %70, %cst_42 [1] : vector<8x8xf32> to vector<8xf32>
    %72 = vector.shape_cast %71 : vector<8xf32> to vector<8x1xf32>
    %73 = vector.broadcast %72 : vector<8x1xf32> to vector<8x8xf32>
    %74 = arith.subf %70, %73 : vector<8x8xf32>
    %75 = math.exp %74 : vector<8x8xf32>
    %cst_43 = arith.constant dense<0.000000e+00> : vector<8xf32>
    %76 = vector.multi_reduction <add>, %75, %cst_43 [1] : vector<8x8xf32> to vector<8xf32>
    %77 = vector.shape_cast %76 : vector<8xf32> to vector<8x1xf32>
    %78 = tpu.reciprocal %77 {approx = true} : vector<8x1xf32> -> vector<8x1xf32>
    %79 = vector.broadcast %78 : vector<8x1xf32> to vector<8x8xf32>
    %80 = arith.mulf %75, %79 : vector<8x8xf32>
    %c0_44 = arith.constant 0 : index
    %c2 = arith.constant 2 : index
    %c0_45 = arith.constant 0 : index
    %c0_46 = arith.constant 0 : index
    %81 = vector.load %arg12[%c0_44, %c2, %c0_45, %c0_46] : memref<1x4x8x8xf32, #tpu.memory_space<vmem>>, vector<1x1x8x8xf32>
    %82 = vector.shape_cast %81 : vector<1x1x8x8xf32> to vector<8x8xf32>
    %83 = vector.shape_cast %80 : vector<8x8xf32> to vector<1x1x8x8xf32>
    tpu.vector_store %arg12[%c0_44, %c2, %c0_45, %c0_46], %83 {strides = array<i32>} : memref<1x4x8x8xf32, #tpu.memory_space<vmem>>, vector<1x1x8x8xf32>,
    %cst_47 = arith.constant dense<0.000000e+00> : vector<8x16xf32>
    %84 = tpu.matmul %80, %64, %cst_47 {dimension_numbers = #tpu.dot_dimension_numbers<[1], [0], [0], [1], [0, 0, 1, 1], [], []>} : vector<8x8xf32>, vector<8x16xf32>, vector<8x16xf32> -> vector<8x16xf32>
    %85 = vector.extract_strided_slice %9 {offsets = [0, 48], sizes = [8, 16], strides = [1, 1]} : vector<8x64xf32> to vector<8x16xf32>
    %86 = vector.extract_strided_slice %11 {offsets = [0, 48], sizes = [8, 16], strides = [1, 1]} : vector<8x64xf32> to vector<8x16xf32>
    %87 = vector.extract_strided_slice %13 {offsets = [0, 48], sizes = [8, 16], strides = [1, 1]} : vector<8x64xf32> to vector<8x16xf32>
    %88 = tpu.transpose %86, [1, 0] : vector<8x16xf32> -> vector<16x8xf32>
    %cst_48 = arith.constant dense<0.000000e+00> : vector<8x8xf32>
    %89 = tpu.matmul %85, %88, %cst_48 {dimension_numbers = #tpu.dot_dimension_numbers<[1], [0], [0], [1], [0, 0, 1, 1], [], []>} : vector<8x16xf32>, vector<16x8xf32>, vector<8x8xf32> -> vector<8x8xf32>
    %cst_49 = arith.constant 2.500000e-01 : f32
    %90 = vector.broadcast %cst_49 : f32 to vector<8x8xf32>
    %91 = arith.mulf %89, %90 : vector<8x8xf32>
    %cst_50 = arith.constant -1.000000e+09 : f32
    %92 = vector.broadcast %cst_50 : f32 to vector<8x8xf32>
    %93 = arith.select %15, %92, %91 : vector<8x8xi1>, vector<8x8xf32>
    %cst_51 = arith.constant dense<0xFF800000> : vector<8xf32>
    %94 = vector.multi_reduction <maximumf>, %93, %cst_51 [1] : vector<8x8xf32> to vector<8xf32>
    %95 = vector.shape_cast %94 : vector<8xf32> to vector<8x1xf32>
    %96 = vector.broadcast %95 : vector<8x1xf32> to vector<8x8xf32>
    %97 = arith.subf %93, %96 : vector<8x8xf32>
    %98 = math.exp %97 : vector<8x8xf32>
    %cst_52 = arith.constant dense<0.000000e+00> : vector<8xf32>
    %99 = vector.multi_reduction <add>, %98, %cst_52 [1] : vector<8x8xf32> to vector<8xf32>
    %100 = vector.shape_cast %99 : vector<8xf32> to vector<8x1xf32>
    %101 = tpu.reciprocal %100 {approx = true} : vector<8x1xf32> -> vector<8x1xf32>
    %102 = vector.broadcast %101 : vector<8x1xf32> to vector<8x8xf32>
    %103 = arith.mulf %98, %102 : vector<8x8xf32>
    %c0_53 = arith.constant 0 : index
    %c3 = arith.constant 3 : index
    %c0_54 = arith.constant 0 : index
    %c0_55 = arith.constant 0 : index
    %104 = vector.load %arg12[%c0_53, %c3, %c0_54, %c0_55] : memref<1x4x8x8xf32, #tpu.memory_space<vmem>>, vector<1x1x8x8xf32>
    %105 = vector.shape_cast %104 : vector<1x1x8x8xf32> to vector<8x8xf32>
    %106 = vector.shape_cast %103 : vector<8x8xf32> to vector<1x1x8x8xf32>
    tpu.vector_store %arg12[%c0_53, %c3, %c0_54, %c0_55], %106 {strides = array<i32>} : memref<1x4x8x8xf32, #tpu.memory_space<vmem>>, vector<1x1x8x8xf32>,
    %cst_56 = arith.constant dense<0.000000e+00> : vector<8x16xf32>
    %107 = tpu.matmul %103, %87, %cst_56 {dimension_numbers = #tpu.dot_dimension_numbers<[1], [0], [0], [1], [0, 0, 1, 1], [], []>} : vector<8x8xf32>, vector<8x16xf32>, vector<8x16xf32> -> vector<8x16xf32>
    %108 = tpu.concatenate %38, %61, %84, %107 in 1 : vector<8x16xf32>, vector<8x16xf32>, vector<8x16xf32>, vector<8x16xf32> -> vector<8x64xf32>
    %c0_57 = arith.constant 0 : index
    %c0_58 = arith.constant 0 : index
    %109 = vector.load %arg8[%c0_57, %c0_58] : memref<64x32xf32, #tpu.memory_space<vmem>>, vector<64x32xf32>
    %cst_59 = arith.constant dense<0.000000e+00> : vector<8x32xf32>
    %110 = tpu.matmul %108, %109, %cst_59 {dimension_numbers = #tpu.dot_dimension_numbers<[1], [0], [0], [1], [0, 0, 1, 1], [], []>} : vector<8x64xf32>, vector<64x32xf32>, vector<8x32xf32> -> vector<8x32xf32>
    %111 = arith.addf %110, %1 : vector<8x32xf32>
    %cst_60 = arith.constant dense<0.000000e+00> : vector<8xf32>
    %112 = vector.multi_reduction <add>, %111, %cst_60 [1] : vector<8x32xf32> to vector<8xf32>
    %113 = vector.shape_cast %112 : vector<8xf32> to vector<8x1xf32>
    %cst_61 = arith.constant 3.200000e+01 : f32
    %114 = vector.broadcast %cst_61 : f32 to vector<8x1xf32>
    %115 = arith.divf %113, %114 : vector<8x1xf32>
    %116 = vector.broadcast %115 : vector<8x1xf32> to vector<8x32xf32>
    %117 = arith.subf %111, %116 : vector<8x32xf32>
    %118 = arith.mulf %117, %117 : vector<8x32xf32>
    %cst_62 = arith.constant dense<0.000000e+00> : vector<8xf32>
    %119 = vector.multi_reduction <add>, %118, %cst_62 [1] : vector<8x32xf32> to vector<8xf32>
    %120 = vector.shape_cast %119 : vector<8xf32> to vector<8x1xf32>
    %cst_63 = arith.constant 3.200000e+01 : f32
    %121 = vector.broadcast %cst_63 : f32 to vector<8x1xf32>
    %122 = arith.divf %120, %121 : vector<8x1xf32>
    %123 = vector.broadcast %115 : vector<8x1xf32> to vector<8x32xf32>
    %124 = arith.subf %111, %123 : vector<8x32xf32>
    %cst_64 = arith.constant 9.99999974E-6 : f32
    %125 = vector.broadcast %cst_64 : f32 to vector<8x1xf32>
    %126 = arith.addf %122, %125 : vector<8x1xf32>
    %127 = math.rsqrt %126 : vector<8x1xf32>
    %128 = vector.broadcast %127 : vector<8x1xf32> to vector<8x32xf32>
    %129 = arith.mulf %124, %128 : vector<8x32xf32>
    %c0_65 = arith.constant 0 : index
    %c0_66 = arith.constant 0 : index
    %130 = vector.load %arg9[%c0_65, %c0_66] : memref<1x32xf32, #tpu.memory_space<vmem>>, vector<1x32xf32>
    %131 = vector.broadcast %130 : vector<1x32xf32> to vector<8x32xf32>
    %132 = arith.mulf %129, %131 : vector<8x32xf32>
    %c0_67 = arith.constant 0 : index
    %c0_68 = arith.constant 0 : index
    %133 = vector.load %arg10[%c0_67, %c0_68] : memref<1x32xf32, #tpu.memory_space<vmem>>, vector<1x32xf32>
    %134 = vector.broadcast %133 : vector<1x32xf32> to vector<8x32xf32>
    %135 = arith.addf %132, %134 : vector<8x32xf32>
    %c0_69 = arith.constant 0 : index
    %c0_70 = arith.constant 0 : index
    %c0_71 = arith.constant 0 : index
    %136 = vector.load %arg11[%c0_69, %c0_70, %c0_71] : memref<1x8x32xf32, #tpu.memory_space<vmem>>, vector<1x8x32xf32>
    %137 = vector.shape_cast %136 : vector<1x8x32xf32> to vector<8x32xf32>
    %138 = vector.shape_cast %135 : vector<8x32xf32> to vector<1x8x32xf32>
    tpu.vector_store %arg11[%c0_69, %c0_70, %c0_71], %138 {strides = array<i32>} : memref<1x8x32xf32, #tpu.memory_space<vmem>>, vector<1x8x32xf32>,
    return
  }
  func.func @transform_0(%arg0: i32) -> (i32, i32, i32) {
    %c0_i32 = arith.constant 0 : i32
    %c0_i32_0 = arith.constant 0 : i32
    %c0_i32_1 = arith.constant 0 : i32
    return %arg0, %c0_i32, %c0_i32_0 : i32, i32, i32
  }
  func.func @transform_1(%arg0: i32) -> (i32, i32, i32) {
    %c0_i32 = arith.constant 0 : i32
    %c0_i32_0 = arith.constant 0 : i32
    %c0_i32_1 = arith.constant 0 : i32
    return %arg0, %c0_i32, %c0_i32_0 : i32, i32, i32
  }
  func.func @transform_2(%arg0: i32) -> (i32, i32, i32) {
    %c0_i32 = arith.constant 0 : i32
    %c0_i32_0 = arith.constant 0 : i32
    %c0_i32_1 = arith.constant 0 : i32
    return %arg0, %c0_i32, %c0_i32_0 : i32, i32, i32
  }
  func.func @transform_3(%arg0: i32) -> (i32, i32, i32) {
    %c0_i32 = arith.constant 0 : i32
    %c0_i32_0 = arith.constant 0 : i32
    %c0_i32_1 = arith.constant 0 : i32
    return %arg0, %c0_i32, %c0_i32_0 : i32, i32, i32
  }
  func.func @transform_4(%arg0: i32) -> (i32, i32) {
    %c0_i32 = arith.constant 0 : i32
    %c0_i32_0 = arith.constant 0 : i32
    %c0_i32_1 = arith.constant 0 : i32
    return %c0_i32, %c0_i32_0 : i32, i32
  }
  func.func @transform_5(%arg0: i32) -> (i32, i32) {
    %c0_i32 = arith.constant 0 : i32
    %c0_i32_0 = arith.constant 0 : i32
    %c0_i32_1 = arith.constant 0 : i32
    return %c0_i32, %c0_i32_0 : i32, i32
  }
  func.func @transform_6(%arg0: i32) -> (i32, i32) {
    %c0_i32 = arith.constant 0 : i32
    %c0_i32_0 = arith.constant 0 : i32
    %c0_i32_1 = arith.constant 0 : i32
    return %c0_i32, %c0_i32_0 : i32, i32
  }
  func.func @transform_7(%arg0: i32) -> (i32, i32) {
    %c0_i32 = arith.constant 0 : i32
    %c0_i32_0 = arith.constant 0 : i32
    %c0_i32_1 = arith.constant 0 : i32
    return %c0_i32, %c0_i32_0 : i32, i32
  }
  func.func @transform_8(%arg0: i32) -> (i32, i32) {
    %c0_i32 = arith.constant 0 : i32
    %c0_i32_0 = arith.constant 0 : i32
    %c0_i32_1 = arith.constant 0 : i32
    return %c0_i32, %c0_i32_0 : i32, i32
  }
  func.func @transform_9(%arg0: i32) -> (i32, i32) {
    %c0_i32 = arith.constant 0 : i32
    %c0_i32_0 = arith.constant 0 : i32
    %c0_i32_1 = arith.constant 0 : i32
    return %c0_i32, %c0_i32_0 : i32, i32
  }
  func.func @transform_10(%arg0: i32) -> (i32, i32, i32) {
    %c0_i32 = arith.constant 0 : i32
    %c0_i32_0 = arith.constant 0 : i32
    %c0_i32_1 = arith.constant 0 : i32
    return %arg0, %c0_i32, %c0_i32_0 : i32, i32, i32
  }
  func.func @transform_11(%arg0: i32) -> (i32, i32, i32, i32) {
    %c0_i32 = arith.constant 0 : i32
    %c0_i32_0 = arith.constant 0 : i32
    %c0_i32_1 = arith.constant 0 : i32
    %c0_i32_2 = arith.constant 0 : i32
    return %arg0, %c0_i32, %c0_i32_0, %c0_i32_1 : i32, i32, i32, i32
  }
}

</mosaic_0001>

<llo_original>
// kernel: tpu_custom_call.1
$region0: #{tpu_custom_call.1}
  #allocation0 [shape = 'u32[]', space=smem, size = 0x4, offset = 0x4, fixed_abs, tag = 'smem constant byte address 0x4 - core index']
  #allocation1 [shape = 'u32[72,128]{1,0:T(1,128)}', space=vmem, size = 0x9000, scoped, tag = 'internal scratch']
  %s0 = inlined_call_operand.hbm [shape: f32[2,8,32], index: 0, kind: input, shape index: {}]
  %s1 = inlined_call_operand.hbm [shape: f32[2,8,32], index: 1, kind: input, shape index: {}]
  %s2 = inlined_call_operand.hbm [shape: f32[2,8,32], index: 2, kind: input, shape index: {}]
  %s3 = inlined_call_operand.hbm [shape: f32[2,8,8], index: 3, kind: input, shape index: {}]
  %s4 = inlined_call_operand.vmem [shape: f32[32,64], index: 4, kind: input, shape index: {}]
  %s5 = inlined_call_operand.vmem [shape: f32[32,64], index: 5, kind: input, shape index: {}]
  %s6 = inlined_call_operand.vmem [shape: f32[32,64], index: 6, kind: input, shape index: {}]
  %s7 = inlined_call_operand.vmem [shape: f32[64,32], index: 7, kind: input, shape index: {}]
  %s8 = inlined_call_operand.vmem [shape: f32[1,32], index: 8, kind: input, shape index: {}]
  %s9 = inlined_call_operand.vmem [shape: f32[1,32], index: 9, kind: input, shape index: {}]
  %s10 = inlined_call_operand.hbm [shape: f32[2,8,32], index: 10, kind: output, shape index: {0}]
  %s11 = inlined_call_operand.hbm [shape: f32[2,4,8,8], index: 11, kind: output, shape index: {1}]
  %12 = xla_tuple %s10, %s11
  %s13 = sld [smem:[#allocation0]]
  $region97: #{tpu_custom_call.1} parent=0
    _
  %s15 = ssub.s32 1, %s13
  %s16 = scalar_select 0, %s15, %s13
  $region1: #{tpu_custom_call.1} parent=0
    #allocation2 [shape = 'u8[8192]{0}', space=vmem, size = 0x2000, scoped, tag = 'input window, operand 0']
    #allocation3 [shape = 's32[2]{0}', space=sflag, size = 0x8, scoped, tag = 'scoped memory for tpu_custom_call.1']
    #allocation4 [shape = 's32[2]{0}', space=sflag, size = 0x8, scoped, tag = 'scoped memory for tpu_custom_call.1']
    #allocation5 [shape = 'u8[8192]{0}', space=vmem, size = 0x2000, scoped, tag = 'input window, operand 1']
    #allocation6 [shape = 's32[2]{0}', space=sflag, size = 0x8, scoped, tag = 'scoped memory for tpu_custom_call.1']
    #allocation7 [shape = 'u8[8192]{0}', space=vmem, size = 0x2000, scoped, tag = 'input window, operand 2']
    #allocation8 [shape = 'u8[8192]{0}', space=vmem, size = 0x2000, scoped, tag = 'input window, operand 3']
    #allocation9 [shape = 's32[2]{0}', space=sflag, size = 0x8, scoped, tag = 'scoped memory for tpu_custom_call.1']
    #allocation10 [shape = 'u8[8192]{0}', space=vmem, size = 0x2000, scoped, tag = 'output window, operand 0']
    #allocation11 [shape = 'u8[32768]{0}', space=vmem, size = 0x8000, scoped, tag = 'output window, operand 1']
    #allocation12 [shape = 's32[2]{0}', space=sflag, size = 0x8, scoped, tag = 'scoped memory for tpu_custom_call.1']
    %17 = vsyncpa [#allocation3], 0
    %s18 = scalar_lea.sflag [#allocation3], 1
    %19 = vsyncpa %s18, 0
    %20 = vsyncpa [#allocation6], 0
    %s21 = scalar_lea.sflag [#allocation6], 1
    %22 = vsyncpa %s21, 0
    %23 = vsyncpa [#allocation9], 0
    %s24 = scalar_lea.sflag [#allocation9], 1
    %25 = vsyncpa %s24, 0
    %26 = vsyncpa [#allocation4], 0
    %s27 = scalar_lea.sflag [#allocation4], 1
    %28 = vsyncpa %s27, 0
    %29 = vsyncpa [#allocation12], 0
    %s30 = scalar_lea.sflag [#allocation12], 1
    %31 = vsyncpa %s30, 0
    loop: start=0, step=1, limit=4
    $region2: #{tpu_custom_call.1} parent=1 // loop_pre_header
      _
    $region3: #{tpu_custom_call.1} parent=1 // loop_header
      %s33 = sphi 0, %s37
      %p34 = scmp.ge.s32.totalorder %s33, 4
      %s43 = sphi 0, %s45
      %s46 = sphi 0, %s43
      %s47 = sphi 0, %s46
      %s63 = sphi 0, %s47
      %s69 = sphi 0, %s71
      %s72 = sphi 0, %s69
      %s73 = sphi 0, %s72
      %s89 = sphi 0, %s73
      %s95 = sphi 0, %s97
      %s98 = sphi 0, %s95
      %s99 = sphi 0, %s98
      %s115 = sphi 0, %s99
      %s121 = sphi 0, %s123
      %s124 = sphi 0, %s121
      %s125 = sphi 0, %s124
      %s141 = sphi 0, %s125
      %s145 = sphi 0, %s145
      %s147 = sphi 0, %s145
      %s148 = sphi 0, %s147
      %s162 = sphi 0, %s148
      %s166 = sphi 0, %s166
      %s168 = sphi 0, %s166
      %s169 = sphi 0, %s168
      %s183 = sphi 0, %s169
      %s187 = sphi 0, %s187
      %s189 = sphi 0, %s187
      %s190 = sphi 0, %s189
      %s204 = sphi 0, %s190
      %s208 = sphi 0, %s208
      %s210 = sphi 0, %s208
      %s211 = sphi 0, %s210
      %s225 = sphi 0, %s211
      %s229 = sphi 0, %s229
      %s231 = sphi 0, %s229
      %s232 = sphi 0, %s231
      %s246 = sphi 0, %s232
      %s250 = sphi 0, %s250
      %s252 = sphi 0, %s250
      %s253 = sphi 0, %s252
      %s267 = sphi 0, %s253
      %s273 = sphi 0, %s275
      %s276 = sphi 0, %s273
      %s277 = sphi 0, %s276
      %s293 = sphi 0, %s277
      %s299 = sphi 0, %s301
      %s302 = sphi 0, %s299
      %s303 = sphi 0, %s302
      %s319 = sphi 0, %s303
    $region4: #{tpu_custom_call.1} parent=1 // loop_header_branch
      %36 = sbr.rel (%p34) target = $region8
    $region5: #{tpu_custom_call.1} parent=1 // loop_body
      %s38 = ssub.s32 %s33, 1
      %s39 = ssub.s32 %s33, 2
      %s40 = sadd.s32 %s33, 1
      %s41 = ssub.s32 %s33, %s40
      %p42 = scmp.eq.s32.totalorder %s41, 0
      %s44 = sadd.s32 %s43, 1
      %s45 = scalar_select %p42, %s43, %s44
      %p48 = pneg %p42
      %p49 = scmp.eq.s32.totalorder %s33, 1
      %p50 = por %p48, %p49
      %p51 = scmp.ne.s32.totalorder %s43, %s46
      %p52 = scmp.eq.s32.totalorder %s33, 0
      %p53 = por %p51, %p52
      %p54 = scmp.ne.s32.totalorder %s43, %s46
      %p55 = scmp.eq.s32.totalorder %s38, 1
      %p56 = por %p54, %p55
      %p57 = scmp.ne.s32.totalorder %s46, %s47
      %p58 = scmp.eq.s32.totalorder %s38, 0
      %p59 = por %p57, %p58
      %p60 = scmp.ne.s32.totalorder %s46, %s47
      %p61 = scmp.eq.s32.totalorder %s39, 1
      %p62 = por %p60, %p61
      %p64 = scmp.ne.s32.totalorder %s47, %s63
      %p65 = scmp.eq.s32.totalorder %s39, 0
      %p66 = por %p64, %p65
      %s67 = ssub.s32 %s33, %s40
      %p68 = scmp.eq.s32.totalorder %s67, 0
      %s70 = sadd.s32 %s69, 1
      %s71 = scalar_select %p68, %s69, %s70
      %p74 = pneg %p68
      %p75 = scmp.eq.s32.totalorder %s33, 1
      %p76 = por %p74, %p75
      %p77 = scmp.ne.s32.totalorder %s69, %s72
      %p78 = scmp.eq.s32.totalorder %s33, 0
      %p79 = por %p77, %p78
      %p80 = scmp.ne.s32.totalorder %s69, %s72
      %p81 = scmp.eq.s32.totalorder %s38, 1
      %p82 = por %p80, %p81
      %p83 = scmp.ne.s32.totalorder %s72, %s73
      %p84 = scmp.eq.s32.totalorder %s38, 0
      %p85 = por %p83, %p84
      %p86 = scmp.ne.s32.totalorder %s72, %s73
      %p87 = scmp.eq.s32.totalorder %s39, 1
      %p88 = por %p86, %p87
      %p90 = scmp.ne.s32.totalorder %s73, %s89
      %p91 = scmp.eq.s32.totalorder %s39, 0
      %p92 = por %p90, %p91
      %s93 = ssub.s32 %s33, %s40
      %p94 = scmp.eq.s32.totalorder %s93, 0
      %s96 = sadd.s32 %s95, 1
      %s97 = scalar_select %p94, %s95, %s96
      %p100 = pneg %p94
      %p101 = scmp.eq.s32.totalorder %s33, 1
      %p102 = por %p100, %p101
      %p103 = scmp.ne.s32.totalorder %s95, %s98
      %p104 = scmp.eq.s32.totalorder %s33, 0
      %p105 = por %p103, %p104
      %p106 = scmp.ne.s32.totalorder %s95, %s98
      %p107 = scmp.eq.s32.totalorder %s38, 1
      %p108 = por %p106, %p107
      %p109 = scmp.ne.s32.totalorder %s98, %s99
      %p110 = scmp.eq.s32.totalorder %s38, 0
      %p111 = por %p109, %p110
      %p112 = scmp.ne.s32.totalorder %s98, %s99
      %p113 = scmp.eq.s32.totalorder %s39, 1
      %p114 = por %p112, %p113
      %p116 = scmp.ne.s32.totalorder %s99, %s115
      %p117 = scmp.eq.s32.totalorder %s39, 0
      %p118 = por %p116, %p117
      %s119 = ssub.s32 %s33, %s40
      %p120 = scmp.eq.s32.totalorder %s119, 0
      %s122 = sadd.s32 %s121, 1
      %s123 = scalar_select %p120, %s121, %s122
      %p126 = pneg %p120
      %p127 = scmp.eq.s32.totalorder %s33, 1
      %p128 = por %p126, %p127
      %p129 = scmp.ne.s32.totalorder %s121, %s124
      %p130 = scmp.eq.s32.totalorder %s33, 0
      %p131 = por %p129, %p130
      %p132 = scmp.ne.s32.totalorder %s121, %s124
      %p133 = scmp.eq.s32.totalorder %s38, 1
      %p134 = por %p132, %p133
      %p135 = scmp.ne.s32.totalorder %s124, %s125
      %p136 = scmp.eq.s32.totalorder %s38, 0
      %p137 = por %p135, %p136
      %p138 = scmp.ne.s32.totalorder %s124, %s125
      %p139 = scmp.eq.s32.totalorder %s39, 1
      %p140 = por %p138, %p139
      %p142 = scmp.ne.s32.totalorder %s125, %s141
      %p143 = scmp.eq.s32.totalorder %s39, 0
      %p144 = por %p142, %p143
      %s146 = sadd.s32 %s145, 1
      %p149 = scmp.eq.s32.totalorder %s33, 1
      %p150 = scmp.ne.s32.totalorder %s145, %s147
      %p151 = scmp.eq.s32.totalorder %s33, 0
      %p152 = por %p150, %p151
      %p153 = scmp.ne.s32.totalorder %s145, %s147
      %p154 = scmp.eq.s32.totalorder %s38, 1
      %p155 = por %p153, %p154
      %p156 = scmp.ne.s32.totalorder %s147, %s148
      %p157 = scmp.eq.s32.totalorder %s38, 0
      %p158 = por %p156, %p157
      %p159 = scmp.ne.s32.totalorder %s147, %s148
      %p160 = scmp.eq.s32.totalorder %s39, 1
      %p161 = por %p159, %p160
      %p163 = scmp.ne.s32.totalorder %s148, %s162
      %p164 = scmp.eq.s32.totalorder %s39, 0
      %p165 = por %p163, %p164
      %s167 = sadd.s32 %s166, 1
      %p170 = scmp.eq.s32.totalorder %s33, 1
      %p171 = scmp.ne.s32.totalorder %s166, %s168
      %p172 = scmp.eq.s32.totalorder %s33, 0
      %p173 = por %p171, %p172
      %p174 = scmp.ne.s32.totalorder %s166, %s168
      %p175 = scmp.eq.s32.totalorder %s38, 1
      %p176 = por %p174, %p175
      %p177 = scmp.ne.s32.totalorder %s168, %s169
      %p178 = scmp.eq.s32.totalorder %s38, 0
      %p179 = por %p177, %p178
      %p180 = scmp.ne.s32.totalorder %s168, %s169
      %p181 = scmp.eq.s32.totalorder %s39, 1
      %p182 = por %p180, %p181
      %p184 = scmp.ne.s32.totalorder %s169, %s183
      %p185 = scmp.eq.s32.totalorder %s39, 0
      %p186 = por %p184, %p185
      %s188 = sadd.s32 %s187, 1
      %p191 = scmp.eq.s32.totalorder %s33, 1
      %p192 = scmp.ne.s32.totalorder %s187, %s189
      %p193 = scmp.eq.s32.totalorder %s33, 0
      %p194 = por %p192, %p193
      %p195 = scmp.ne.s32.totalorder %s187, %s189
      %p196 = scmp.eq.s32.totalorder %s38, 1
      %p197 = por %p195, %p196
      %p198 = scmp.ne.s32.totalorder %s189, %s190
      %p199 = scmp.eq.s32.totalorder %s38, 0
      %p200 = por %p198, %p199
      %p201 = scmp.ne.s32.totalorder %s189, %s190
      %p202 = scmp.eq.s32.totalorder %s39, 1
      %p203 = por %p201, %p202
      %p205 = scmp.ne.s32.totalorder %s190, %s204
      %p206 = scmp.eq.s32.totalorder %s39, 0
      %p207 = por %p205, %p206
      %s209 = sadd.s32 %s208, 1
      %p212 = scmp.eq.s32.totalorder %s33, 1
      %p213 = scmp.ne.s32.totalorder %s208, %s210
      %p214 = scmp.eq.s32.totalorder %s33, 0
      %p215 = por %p213, %p214
      %p216 = scmp.ne.s32.totalorder %s208, %s210
      %p217 = scmp.eq.s32.totalorder %s38, 1
      %p218 = por %p216, %p217
      %p219 = scmp.ne.s32.totalorder %s210, %s211
      %p220 = scmp.eq.s32.totalorder %s38, 0
      %p221 = por %p219, %p220
      %p222 = scmp.ne.s32.totalorder %s210, %s211
      %p223 = scmp.eq.s32.totalorder %s39, 1
      %p224 = por %p222, %p223
      %p226 = scmp.ne.s32.totalorder %s211, %s225
      %p227 = scmp.eq.s32.totalorder %s39, 0
      %p228 = por %p226, %p227
      %s230 = sadd.s32 %s229, 1
      %p233 = scmp.eq.s32.totalorder %s33, 1
      %p234 = scmp.ne.s32.totalorder %s229, %s231
      %p235 = scmp.eq.s32.totalorder %s33, 0
      %p236 = por %p234, %p235
      %p237 = scmp.ne.s32.totalorder %s229, %s231
      %p238 = scmp.eq.s32.totalorder %s38, 1
      %p239 = por %p237, %p238
      %p240 = scmp.ne.s32.totalorder %s231, %s232
      %p241 = scmp.eq.s32.totalorder %s38, 0
      %p242 = por %p240, %p241
      %p243 = scmp.ne.s32.totalorder %s231, %s232
      %p244 = scmp.eq.s32.totalorder %s39, 1
      %p245 = por %p243, %p244
      %p247 = scmp.ne.s32.totalorder %s232, %s246
      %p248 = scmp.eq.s32.totalorder %s39, 0
      %p249 = por %p247, %p248
      %s251 = sadd.s32 %s250, 1
      %p254 = scmp.eq.s32.totalorder %s33, 1
      %p255 = scmp.ne.s32.totalorder %s250, %s252
      %p256 = scmp.eq.s32.totalorder %s33, 0
      %p257 = por %p255, %p256
      %p258 = scmp.ne.s32.totalorder %s250, %s252
      %p259 = scmp.eq.s32.totalorder %s38, 1
      %p260 = por %p258, %p259
      %p261 = scmp.ne.s32.totalorder %s252, %s253
      %p262 = scmp.eq.s32.totalorder %s38, 0
      %p263 = por %p261, %p262
      %p264 = scmp.ne.s32.totalorder %s252, %s253
      %p265 = scmp.eq.s32.totalorder %s39, 1
      %p266 = por %p264, %p265
      %p268 = scmp.ne.s32.totalorder %s253, %s267
      %p269 = scmp.eq.s32.totalorder %s39, 0
      %p270 = por %p268, %p269
      %s271 = ssub.s32 %s33, %s40
      %p272 = scmp.eq.s32.totalorder %s271, 0
      %s274 = sadd.s32 %s273, 1
      %s275 = scalar_select %p272, %s273, %s274
      %p278 = pneg %p272
      %p279 = scmp.eq.s32.totalorder %s33, 1
      %p280 = por %p278, %p279
      %p281 = scmp.ne.s32.totalorder %s273, %s276
      %p282 = scmp.eq.s32.totalorder %s33, 0
      %p283 = por %p281, %p282
      %p284 = scmp.ne.s32.totalorder %s273, %s276
      %p285 = scmp.eq.s32.totalorder %s38, 1
      %p286 = por %p284, %p285
      %p287 = scmp.ne.s32.totalorder %s276, %s277
      %p288 = scmp.eq.s32.totalorder %s38, 0
      %p289 = por %p287, %p288
      %p290 = scmp.ne.s32.totalorder %s276, %s277
      %p291 = scmp.eq.s32.totalorder %s39, 1
      %p292 = por %p290, %p291
      %p294 = scmp.ne.s32.totalorder %s277, %s293
      %p295 = scmp.eq.s32.totalorder %s39, 0
      %p296 = por %p294, %p295
      %s297 = ssub.s32 %s33, %s40
      %p298 = scmp.eq.s32.totalorder %s297, 0
      %s300 = sadd.s32 %s299, 1
      %s301 = scalar_select %p298, %s299, %s300
      %p304 = pneg %p298
      %p305 = scmp.eq.s32.totalorder %s33, 1
      %p306 = por %p304, %p305
      %p307 = scmp.ne.s32.totalorder %s299, %s302
      %p308 = scmp.eq.s32.totalorder %s33, 0
      %p309 = por %p307, %p308
      %p310 = scmp.ne.s32.totalorder %s299, %s302
      %p311 = scmp.eq.s32.totalorder %s38, 1
      %p312 = por %p310, %p311
      %p313 = scmp.ne.s32.totalorder %s302, %s303
      %p314 = scmp.eq.s32.totalorder %s38, 0
      %p315 = por %p313, %p314
      %p316 = scmp.ne.s32.totalorder %s302, %s303
      %p317 = scmp.eq.s32.totalorder %s39, 1
      %p318 = por %p316, %p317
      %p320 = scmp.ne.s32.totalorder %s303, %s319
      %p321 = scmp.eq.s32.totalorder %s39, 0
      %p322 = por %p320, %p321
      %p323 = scmp.le.s32.totalorder 1, %s33
      %p324 = scmp.lt.s32.totalorder %s33, 3
      %p325 = pnand %p323, %p324
      %p326 = pneg %p325
      // Predicated region
      $region9: #{tpu_custom_call.1} parent=5 // pred_check
        _
      $region10: #{tpu_custom_call.1} parent=5 // pred_check_branch
        %328 = sbr.rel (%p325) target = $region12
      $region11: #{tpu_custom_call.1} parent=5 // pred_region
        %s329 = ssub.s32 %s33, 1
        // Predicated region
        $region13: #{tpu_custom_call.1} parent=11 // pred_check
          %p330 = pneg %p158
        $region14: #{tpu_custom_call.1} parent=11 // pred_check_branch
          %332 = sbr.rel (%p330) target = $region16
        $region15: #{tpu_custom_call.1} parent=11 // pred_region
          _
        $region16: #{tpu_custom_call.1} parent=11 // pred_fallthru
          _
        // Predicated region
        $region17: #{tpu_custom_call.1} parent=11 // pred_check
          %p333 = pneg %p179
        $region18: #{tpu_custom_call.1} parent=11 // pred_check_branch
          %335 = sbr.rel (%p333) target = $region20
        $region19: #{tpu_custom_call.1} parent=11 // pred_region
          _
        $region20: #{tpu_custom_call.1} parent=11 // pred_fallthru
          _
        // Predicated region
        $region21: #{tpu_custom_call.1} parent=11 // pred_check
          %p336 = pneg %p200
        $region22: #{tpu_custom_call.1} parent=11 // pred_check_branch
          %338 = sbr.rel (%p336) target = $region24
        $region23: #{tpu_custom_call.1} parent=11 // pred_region
          _
        $region24: #{tpu_custom_call.1} parent=11 // pred_fallthru
          _
        // Predicated region
        $region25: #{tpu_custom_call.1} parent=11 // pred_check
          %p339 = pneg %p221
        $region26: #{tpu_custom_call.1} parent=11 // pred_check_branch
          %341 = sbr.rel (%p339) target = $region28
        $region27: #{tpu_custom_call.1} parent=11 // pred_region
          _
        $region28: #{tpu_custom_call.1} parent=11 // pred_fallthru
          _
        // Predicated region
        $region29: #{tpu_custom_call.1} parent=11 // pred_check
          %p342 = pneg %p242
        $region30: #{tpu_custom_call.1} parent=11 // pred_check_branch
          %344 = sbr.rel (%p342) target = $region32
        $region31: #{tpu_custom_call.1} parent=11 // pred_region
          _
        $region32: #{tpu_custom_call.1} parent=11 // pred_fallthru
          _
        // Predicated region
        $region33: #{tpu_custom_call.1} parent=11 // pred_check
          %p345 = pneg %p263
        $region34: #{tpu_custom_call.1} parent=11 // pred_check_branch
          %347 = sbr.rel (%p345) target = $region36
        $region35: #{tpu_custom_call.1} parent=11 // pred_region
          _
        $region36: #{tpu_custom_call.1} parent=11 // pred_fallthru
          _
      $region12: #{tpu_custom_call.1} parent=5 // pred_fallthru
        _
      %p348 = scmp.lt.s32.totalorder %s33, 2
      // Predicated region
      $region37: #{tpu_custom_call.1} parent=5 // pred_check
        %p349 = pneg %p348
      $region38: #{tpu_custom_call.1} parent=5 // pred_check_branch
        %351 = sbr.rel (%p349) target = $region40
      $region39: #{tpu_custom_call.1} parent=5 // pred_region
        // Predicated region
        $region41: #{tpu_custom_call.1} parent=39 // pred_check
          %p352 = pneg %p53
        $region42: #{tpu_custom_call.1} parent=39 // pred_check_branch
          %354 = sbr.rel (%p352) target = $region44
        $region43: #{tpu_custom_call.1} parent=39 // pred_region
          %s355 = sand.u32 %s43, 1
          %s356 = scalar_lea.sflag [#allocation3], %s355
          %s357 = sand.u32 %s43, 1
          %s358 = smul.addr %s357, 8
          %s359 = scalar_lea.vmem [#allocation2], %s358
          %361 = vsyncadd %s356, 0
          %s362 = smul.addr %s33, 8
          %s363 = scalar_lea.hbm %s0, %s362
          %s365 = sshll.u32 %s363, 4
          %s366 = int_to_ptr.hbm [resolvable:$true] %s365
          %s367 = sshll.u32 %s359, 4
          %s368 = int_to_ptr.vmem [resolvable:$true] %s367
          %370 = dma.hbm_to_vmem [thread:$0]  %s366, 128, %s368, %s356
        $region44: #{tpu_custom_call.1} parent=39 // pred_fallthru
          _
        // Predicated region
        $region45: #{tpu_custom_call.1} parent=39 // pred_check
          %p371 = pneg %p79
        $region46: #{tpu_custom_call.1} parent=39 // pred_check_branch
          %373 = sbr.rel (%p371) target = $region48
        $region47: #{tpu_custom_call.1} parent=39 // pred_region
          %s374 = sand.u32 %s33, 1
          %s375 = scalar_lea.sflag [#allocation6], %s374
          %s376 = sand.u32 %s69, 1
          %s377 = smul.addr %s376, 8
          %s378 = scalar_lea.vmem [#allocation5], %s377
          %380 = vsyncadd %s375, 0
          %s381 = smul.addr %s33, 8
          %s382 = scalar_lea.hbm %s1, %s381
          %s384 = sshll.u32 %s382, 4
          %s385 = int_to_ptr.hbm [resolvable:$true] %s384
          %s386 = sshll.u32 %s378, 4
          %s387 = int_to_ptr.vmem [resolvable:$true] %s386
          %389 = dma.hbm_to_vmem [thread:$0]  %s385, 128, %s387, %s375
        $region48: #{tpu_custom_call.1} parent=39 // pred_fallthru
          _
        // Predicated region
        $region49: #{tpu_custom_call.1} parent=39 // pred_check
          %p390 = pneg %p105
        $region50: #{tpu_custom_call.1} parent=39 // pred_check_branch
          %392 = sbr.rel (%p390) target = $region52
        $region51: #{tpu_custom_call.1} parent=39 // pred_region
          %s393 = sand.u32 %s33, 1
          %s394 = scalar_lea.sflag [#allocation6], %s393
          %s395 = sand.u32 %s95, 1
          %s396 = smul.addr %s395, 8
          %s397 = scalar_lea.vmem [#allocation7], %s396
          %399 = vsyncadd %s394, 0
          %s400 = smul.addr %s33, 8
          %s401 = scalar_lea.hbm %s2, %s400
          %s403 = sshll.u32 %s401, 4
          %s404 = int_to_ptr.hbm [resolvable:$true] %s403
          %s405 = sshll.u32 %s397, 4
          %s406 = int_to_ptr.vmem [resolvable:$true] %s405
          %408 = dma.hbm_to_vmem [thread:$0]  %s404, 128, %s406, %s394
        $region52: #{tpu_custom_call.1} parent=39 // pred_fallthru
          _
        // Predicated region
        $region53: #{tpu_custom_call.1} parent=39 // pred_check
          %p409 = pneg %p131
        $region54: #{tpu_custom_call.1} parent=39 // pred_check_branch
          %411 = sbr.rel (%p409) target = $region56
        $region55: #{tpu_custom_call.1} parent=39 // pred_region
          %s412 = sand.u32 %s121, 1
          %s413 = scalar_lea.sflag [#allocation9], %s412
          %s414 = sand.u32 %s121, 1
          %s415 = smul.addr %s414, 8
          %s416 = scalar_lea.vmem [#allocation8], %s415
          %418 = vsyncadd %s413, 0
          %s419 = smul.addr %s33, 8
          %s420 = scalar_lea.hbm %s3, %s419
          %s422 = sshll.u32 %s420, 4
          %s423 = int_to_ptr.hbm [resolvable:$true] %s422
          %s424 = sshll.u32 %s416, 4
          %s425 = int_to_ptr.vmem [resolvable:$true] %s424
          %427 = dma.hbm_to_vmem [thread:$0]  %s423, 128, %s425, %s413
        $region56: #{tpu_custom_call.1} parent=39 // pred_fallthru
          _
      $region40: #{tpu_custom_call.1} parent=5 // pred_fallthru
        _
      %p428 = scmp.le.s32.totalorder 1, %s33
      %p429 = scmp.lt.s32.totalorder %s33, 3
      %p430 = pnand %p428, %p429
      %p431 = pneg %p430
      // Predicated region
      $region57: #{tpu_custom_call.1} parent=5 // pred_check
        _
      $region58: #{tpu_custom_call.1} parent=5 // pred_check_branch
        %433 = sbr.rel (%p430) target = $region60
      $region59: #{tpu_custom_call.1} parent=5 // pred_region
        %s434 = ssub.s32 %s33, 1
        %s435 = sand.u32 %s46, 1
        %s436 = scalar_lea.sflag [#allocation3], %s435
        %s437 = sand.u32 %s46, 1
        %s438 = smul.addr %s437, 8
        %s439 = scalar_lea.vmem [#allocation2], %s438
        // Predicated region
        $region61: #{tpu_custom_call.1} parent=59 // pred_check
          %p440 = pneg %p59
        $region62: #{tpu_custom_call.1} parent=59 // pred_check_branch
          %442 = sbr.rel (%p440) target = $region64
        $region63: #{tpu_custom_call.1} parent=59 // pred_region
          %444 = dma.done %s436, 128
        $region64: #{tpu_custom_call.1} parent=59 // pred_fallthru
          _
        %s445 = sand.u32 %s38, 1
        %s446 = scalar_lea.sflag [#allocation6], %s445
        %s447 = sand.u32 %s72, 1
        %s448 = smul.addr %s447, 8
        %s449 = scalar_lea.vmem [#allocation5], %s448
        // Predicated region
        $region65: #{tpu_custom_call.1} parent=59 // pred_check
          %p450 = pneg %p85
        $region66: #{tpu_custom_call.1} parent=59 // pred_check_branch
          %452 = sbr.rel (%p450) target = $region68
        $region67: #{tpu_custom_call.1} parent=59 // pred_region
          %454 = dma.done %s446, 128
        $region68: #{tpu_custom_call.1} parent=59 // pred_fallthru
          _
        %s455 = sand.u32 %s38, 1
        %s456 = scalar_lea.sflag [#allocation6], %s455
        %s457 = sand.u32 %s98, 1
        %s458 = smul.addr %s457, 8
        %s459 = scalar_lea.vmem [#allocation7], %s458
        // Predicated region
        $region69: #{tpu_custom_call.1} parent=59 // pred_check
          %p460 = pneg %p111
        $region70: #{tpu_custom_call.1} parent=59 // pred_check_branch
          %462 = sbr.rel (%p460) target = $region72
        $region71: #{tpu_custom_call.1} parent=59 // pred_region
          %464 = dma.done %s456, 128
        $region72: #{tpu_custom_call.1} parent=59 // pred_fallthru
          _
        %s465 = sand.u32 %s124, 1
        %s466 = scalar_lea.sflag [#allocation9], %s465
        %s467 = sand.u32 %s124, 1
        %s468 = smul.addr %s467, 8
        %s469 = scalar_lea.vmem [#allocation8], %s468
        // Predicated region
        $region73: #{tpu_custom_call.1} parent=59 // pred_check
          %p470 = pneg %p137
        $region74: #{tpu_custom_call.1} parent=59 // pred_check_branch
          %472 = sbr.rel (%p470) target = $region76
        $region75: #{tpu_custom_call.1} parent=59 // pred_region
          %474 = dma.done %s466, 128
        $region76: #{tpu_custom_call.1} parent=59 // pred_fallthru
          _
        %s475 = sand.u32 %s46, 1
        %s476 = scalar_lea.sflag [#allocation3], %s475
        %s477 = sand.u32 %s46, 1
        %s478 = smul.addr %s477, 8
        %s479 = scalar_lea.vmem [#allocation2], %s478
        %p480 = pneg %p59
        %p481 = pneg %p56
        %s482 = sand.u32 %s38, 1
        %s483 = scalar_lea.sflag [#allocation6], %s482
        %s484 = sand.u32 %s72, 1
        %s485 = smul.addr %s484, 8
        %s486 = scalar_lea.vmem [#allocation5], %s485
        %p487 = pneg %p85
        %p488 = pneg %p82
        %s489 = sand.u32 %s38, 1
        %s490 = scalar_lea.sflag [#allocation6], %s489
        %s491 = sand.u32 %s98, 1
        %s492 = smul.addr %s491, 8
        %s493 = scalar_lea.vmem [#allocation7], %s492
        %p494 = pneg %p111
        %p495 = pneg %p108
        %s496 = sand.u32 %s124, 1
        %s497 = scalar_lea.sflag [#allocation9], %s496
        %s498 = sand.u32 %s124, 1
        %s499 = smul.addr %s498, 8
        %s500 = scalar_lea.vmem [#allocation8], %s499
        %p501 = pneg %p137
        %p502 = pneg %p134
        %p503 = pneg %p158
        %p504 = pneg %p155
        %p505 = pneg %p179
        %p506 = pneg %p176
        %p507 = pneg %p200
        %p508 = pneg %p197
        %p509 = pneg %p221
        %p510 = pneg %p218
        %p511 = pneg %p242
        %p512 = pneg %p239
        %p513 = pneg %p263
        %p514 = pneg %p260
        %p515 = pneg %p289
        %p516 = pneg %p286
        %s517 = sand.u32 %s276, 1
        %s518 = scalar_lea.sflag [#allocation4], %s517
        %s519 = sand.u32 %s276, 1
        %s520 = smul.addr %s519, 8
        %s521 = scalar_lea.vmem [#allocation10], %s520
        %p522 = pneg %p315
        %p523 = pneg %p312
        %s524 = sand.u32 %s302, 1
        %s525 = scalar_lea.sflag [#allocation12], %s524
        %s526 = sand.u32 %s302, 1
        %s527 = smul.addr %s526, 32
        %s528 = scalar_lea.vmem [#allocation11], %s527
        %v529 = vld [vmem:[%s439] sm:$0xff]
        %v530 = vld [vmem:[%s449] sm:$0xff]
        %v531 = vld [vmem:[%s459] sm:$0xff]
        %v532 = vld [vmem:[%s469] sm:$0xff]
        %v533 = vld [vmem:[%s4] sm:$0xff]
        %v534 = vld [vmem:[%s4 + $0x8] sm:$0xff]
        %v535 = vld [vmem:[%s4 + $0x10] sm:$0xff]
        %v536 = vld [vmem:[%s4 + $0x18] sm:$0xff]
        %vm537 = vcmask 261120
        %v539 = vsel %vm537, %v529, 0
        %541 = vmatpush.msra.mxu0 0.0
        %542 = vmatpush.msra.mxu0 0.0
        %543 = vmatpush.msra.mxu0 0.0
        %544 = vmatpush.msra.mxu0 0.0
        %545 = vmatpush.msra.mxu0 0.0
        %546 = vmatpush.msra.mxu0 0.0
        %547 = vmatpush.msra.mxu0 0.0
        %548 = vmatpush.msra.mxu0 0.0
        %549 = vmatpush.msra.mxu0 0.0
        %550 = vmatpush.msra.mxu0 0.0
        %551 = vmatpush.msra.mxu0 0.0
        %552 = vmatpush.msra.mxu0 0.0
        %553 = vmatpush.msra.mxu0 %v536
        %554 = vmatpush.msra.mxu0 %v535
        %555 = vmatpush.msra.mxu0 %v534
        %556 = vmatpush.msra.mxu0 %v533
        %557 = vmatmul.f32.gmra.mxu0 %v539
        %v558 = vpop.f32.mrf.mxu0
        %v559 = vadd.f32 0.0, %v558
        %560 = vdwg.mxu0
        %v561 = vld [vmem:[%s5] sm:$0xff]
        %v562 = vld [vmem:[%s5 + $0x8] sm:$0xff]
        %v563 = vld [vmem:[%s5 + $0x10] sm:$0xff]
        %v564 = vld [vmem:[%s5 + $0x18] sm:$0xff]
        %v566 = vsel %vm537, %v530, 0
        %568 = vmatpush.msra.mxu0 0.0
        %569 = vmatpush.msra.mxu0 0.0
        %570 = vmatpush.msra.mxu0 0.0
        %571 = vmatpush.msra.mxu0 0.0
        %572 = vmatpush.msra.mxu0 0.0
        %573 = vmatpush.msra.mxu0 0.0
        %574 = vmatpush.msra.mxu0 0.0
        %575 = vmatpush.msra.mxu0 0.0
        %576 = vmatpush.msra.mxu0 0.0
        %577 = vmatpush.msra.mxu0 0.0
        %578 = vmatpush.msra.mxu0 0.0
        %579 = vmatpush.msra.mxu0 0.0
        %580 = vmatpush.msra.mxu0 %v564
        %581 = vmatpush.msra.mxu0 %v563
        %582 = vmatpush.msra.mxu0 %v562
        %583 = vmatpush.msra.mxu0 %v561
        %584 = vmatmul.f32.gmra.mxu0 %v566
        %v585 = vpop.f32.mrf.mxu0
        %v586 = vadd.f32 0.0, %v585
        %587 = vdwg.mxu0
        %v588 = vld [vmem:[%s6] sm:$0xff]
        %v589 = vld [vmem:[%s6 + $0x8] sm:$0xff]
        %v590 = vld [vmem:[%s6 + $0x10] sm:$0xff]
        %v591 = vld [vmem:[%s6 + $0x18] sm:$0xff]
        %v593 = vsel %vm537, %v531, 0
        %595 = vmatpush.msra.mxu0 0.0
        %596 = vmatpush.msra.mxu0 0.0
        %597 = vmatpush.msra.mxu0 0.0
        %598 = vmatpush.msra.mxu0 0.0
        %599 = vmatpush.msra.mxu0 0.0
        %600 = vmatpush.msra.mxu0 0.0
        %601 = vmatpush.msra.mxu0 0.0
        %602 = vmatpush.msra.mxu0 0.0
        %603 = vmatpush.msra.mxu0 0.0
        %604 = vmatpush.msra.mxu0 0.0
        %605 = vmatpush.msra.mxu0 0.0
        %606 = vmatpush.msra.mxu0 0.0
        %607 = vmatpush.msra.mxu0 %v591
        %608 = vmatpush.msra.mxu0 %v590
        %609 = vmatpush.msra.mxu0 %v589
        %610 = vmatpush.msra.mxu0 %v588
        %611 = vmatmul.f32.gmra.mxu0 %v593
        %v612 = vpop.f32.mrf.mxu0
        %v613 = vadd.f32 0.0, %v612
        %614 = vdwg.mxu0
        %vm615 = vcmp.gt.f32.partialorder %v532, 0.5
        %vm616 = vcmask 130048
        %v618 = vsel %vm616, %v559, 0
        %v621 = vsel %vm616, %v586, 0
        %623 = vmatpush.xpose.msra.mxu0 0.0
        %624 = vmatpush.xpose.msra.mxu0 0.0
        %625 = vmatpush.xpose.msra.mxu0 0.0
        %626 = vmatpush.xpose.msra.mxu0 0.0
        %627 = vmatpush.xpose.msra.mxu0 0.0
        %628 = vmatpush.xpose.msra.mxu0 0.0
        %629 = vmatpush.xpose.msra.mxu0 0.0
        %630 = vmatpush.xpose.msra.mxu0 0.0
        %631 = vmatpush.xpose.msra.mxu0 0.0
        %632 = vmatpush.xpose.msra.mxu0 0.0
        %633 = vmatpush.xpose.msra.mxu0 0.0
        %634 = vmatpush.xpose.msra.mxu0 0.0
        %635 = vmatpush.xpose.msra.mxu0 0.0
        %636 = vmatpush.xpose.msra.mxu0 0.0
        %637 = vmatpush.xpose.msra.mxu0 0.0
        %638 = vmatpush.xpose.msra.mxu0 %v621
        %639 = vmatmul.f32.gmra.mxu0 %v618
        %v640 = vpop.f32.mrf.mxu0
        %v641 = vadd.f32 0.0, %v640
        %642 = vdwg.mxu0
        %v643 = vmul.f32 %v641, 0.25
        %v644 = vsel %vm615, -1e+09, %v643
        %vm645 = vcmask 64512
        %v646 = vsel %vm645, %v644, -inf
        %647 = vmax.xlane.f32.xlu0 %v646
        %v648 = vpop.xlane.xlu0 %647
        %v649 = vsub.f32 %v644, %v648
        %v650 = vmul.f32 %v649, 1.442695
        %v651 = vpow.pop %v650
        %v652 = vsel %vm645, %v651, 0.0
        %653 = vadd.xlane.f32.xlu0 %v652
        %v654 = vpop.xlane.xlu0 %653
        %v655 = vrcp.pop %v654
        %v656 = vmul.f32 %v651, %v655
        %657 = vst.msk [vmem:[%s528] sm:$0xff] %vm645, %v656
        %v659 = vsel %vm645, %v656, 0
        %661 = vmatpush.msra.mxu0 0.0
        %662 = vmatpush.msra.mxu0 0.0
        %663 = vmatpush.msra.mxu0 0.0
        %664 = vmatpush.msra.mxu0 0.0
        %665 = vmatpush.msra.mxu0 0.0
        %666 = vmatpush.msra.mxu0 0.0
        %667 = vmatpush.msra.mxu0 0.0
        %668 = vmatpush.msra.mxu0 0.0
        %669 = vmatpush.msra.mxu0 0.0
        %670 = vmatpush.msra.mxu0 0.0
        %671 = vmatpush.msra.mxu0 0.0
        %672 = vmatpush.msra.mxu0 0.0
        %673 = vmatpush.msra.mxu0 0.0
        %674 = vmatpush.msra.mxu0 0.0
        %675 = vmatpush.msra.mxu0 0.0
        %676 = vmatpush.msra.mxu0 %v613
        %677 = vmatmul.f32.gmra.mxu0 %v659
        %v678 = vpop.f32.mrf.mxu0
        %v679 = vadd.f32 0.0, %v678
        %680 = vdwg.mxu0
        %681 = vrot.lane.b32.xlu0 %v559, 112
        %v682 = vpop.permute.xlu0 %681
        %683 = vrot.lane.b32.xlu0 %v586, 112
        %v684 = vpop.permute.xlu0 %683
        %v685 = vsel %vm616, %v682, 0
        %v687 = vsel %vm616, %v684, 0
        %689 = vmatpush.xpose.msra.mxu0 0.0
        %690 = vmatpush.xpose.msra.mxu0 0.0
        %691 = vmatpush.xpose.msra.mxu0 0.0
        %692 = vmatpush.xpose.msra.mxu0 0.0
        %693 = vmatpush.xpose.msra.mxu0 0.0
        %694 = vmatpush.xpose.msra.mxu0 0.0
        %695 = vmatpush.xpose.msra.mxu0 0.0
        %696 = vmatpush.xpose.msra.mxu0 0.0
        %697 = vmatpush.xpose.msra.mxu0 0.0
        %698 = vmatpush.xpose.msra.mxu0 0.0
        %699 = vmatpush.xpose.msra.mxu0 0.0
        %700 = vmatpush.xpose.msra.mxu0 0.0
        %701 = vmatpush.xpose.msra.mxu0 0.0
        %702 = vmatpush.xpose.msra.mxu0 0.0
        %703 = vmatpush.xpose.msra.mxu0 0.0
        %704 = vmatpush.xpose.msra.mxu0 %v687
        %705 = vmatmul.f32.gmra.mxu0 %v685
        %v706 = vpop.f32.mrf.mxu0
        %v707 = vadd.f32 0.0, %v706
        %708 = vdwg.mxu0
        %v709 = vmul.f32 %v707, 0.25
        %v710 = vsel %vm615, -1e+09, %v709
        %v711 = vsel %vm645, %v710, -inf
        %712 = vmax.xlane.f32.xlu0 %v711
        %v713 = vpop.xlane.xlu0 %712
        %v714 = vsub.f32 %v710, %v713
        %v715 = vmul.f32 %v714, 1.442695
        %v716 = vpow.pop %v715
        %v717 = vsel %vm645, %v716, 0.0
        %718 = vadd.xlane.f32.xlu0 %v717
        %v719 = vpop.xlane.xlu0 %718
        %v720 = vrcp.pop %v719
        %v721 = vmul.f32 %v716, %v720
        %s722 = scalar_lea.vmem %s528, 8 [#allocation11]
        %723 = vst.msk [vmem:[%s722] sm:$0xff] %vm645, %v721
        %725 = vrot.lane.b32.xlu0 %v613, 112
        %v726 = vpop.permute.xlu0 %725
        %v729 = vsel %vm645, %v721, 0
        %731 = vmatpush.msra.mxu0 0.0
        %732 = vmatpush.msra.mxu0 0.0
        %733 = vmatpush.msra.mxu0 0.0
        %734 = vmatpush.msra.mxu0 0.0
        %735 = vmatpush.msra.mxu0 0.0
        %736 = vmatpush.msra.mxu0 0.0
        %737 = vmatpush.msra.mxu0 0.0
        %738 = vmatpush.msra.mxu0 0.0
        %739 = vmatpush.msra.mxu0 0.0
        %740 = vmatpush.msra.mxu0 0.0
        %741 = vmatpush.msra.mxu0 0.0
        %742 = vmatpush.msra.mxu0 0.0
        %743 = vmatpush.msra.mxu0 0.0
        %744 = vmatpush.msra.mxu0 0.0
        %745 = vmatpush.msra.mxu0 0.0
        %746 = vmatpush.msra.mxu0 %v726
        %747 = vmatmul.f32.gmra.mxu0 %v729
        %v748 = vpop.f32.mrf.mxu0
        %v749 = vadd.f32 0.0, %v748
        %750 = vdwg.mxu0
        %751 = vrot.lane.b32.xlu0 %v559, 96
        %v752 = vpop.permute.xlu0 %751
        %753 = vrot.lane.b32.xlu0 %v586, 96
        %v754 = vpop.permute.xlu0 %753
        %v755 = vsel %vm616, %v752, 0
        %v757 = vsel %vm616, %v754, 0
        %759 = vmatpush.xpose.msra.mxu0 0.0
        %760 = vmatpush.xpose.msra.mxu0 0.0
        %761 = vmatpush.xpose.msra.mxu0 0.0
        %762 = vmatpush.xpose.msra.mxu0 0.0
        %763 = vmatpush.xpose.msra.mxu0 0.0
        %764 = vmatpush.xpose.msra.mxu0 0.0
        %765 = vmatpush.xpose.msra.mxu0 0.0
        %766 = vmatpush.xpose.msra.mxu0 0.0
        %767 = vmatpush.xpose.msra.mxu0 0.0
        %768 = vmatpush.xpose.msra.mxu0 0.0
        %769 = vmatpush.xpose.msra.mxu0 0.0
        %770 = vmatpush.xpose.msra.mxu0 0.0
        %771 = vmatpush.xpose.msra.mxu0 0.0
        %772 = vmatpush.xpose.msra.mxu0 0.0
        %773 = vmatpush.xpose.msra.mxu0 0.0
        %774 = vmatpush.xpose.msra.mxu0 %v757
        %775 = vmatmul.f32.gmra.mxu0 %v755
        %v776 = vpop.f32.mrf.mxu0
        %v777 = vadd.f32 0.0, %v776
        %778 = vdwg.mxu0
        %v779 = vmul.f32 %v777, 0.25
        %v780 = vsel %vm615, -1e+09, %v779
        %v781 = vsel %vm645, %v780, -inf
        %782 = vmax.xlane.f32.xlu0 %v781
        %v783 = vpop.xlane.xlu0 %782
        %v784 = vsub.f32 %v780, %v783
        %v785 = vmul.f32 %v784, 1.442695
        %v786 = vpow.pop %v785
        %v787 = vsel %vm645, %v786, 0.0
        %788 = vadd.xlane.f32.xlu0 %v787
        %v789 = vpop.xlane.xlu0 %788
        %v790 = vrcp.pop %v789
        %v791 = vmul.f32 %v786, %v790
        %s792 = scalar_lea.vmem %s528, 16 [#allocation11]
        %793 = vst.msk [vmem:[%s792] sm:$0xff] %vm645, %v791
        %794 = vrot.lane.b32.xlu0 %v613, 96
        %v795 = vpop.permute.xlu0 %794
        %v798 = vsel %vm645, %v791, 0
        %800 = vmatpush.msra.mxu0 0.0
        %801 = vmatpush.msra.mxu0 0.0
        %802 = vmatpush.msra.mxu0 0.0
        %803 = vmatpush.msra.mxu0 0.0
        %804 = vmatpush.msra.mxu0 0.0
        %805 = vmatpush.msra.mxu0 0.0
        %806 = vmatpush.msra.mxu0 0.0
        %807 = vmatpush.msra.mxu0 0.0
        %808 = vmatpush.msra.mxu0 0.0
        %809 = vmatpush.msra.mxu0 0.0
        %810 = vmatpush.msra.mxu0 0.0
        %811 = vmatpush.msra.mxu0 0.0
        %812 = vmatpush.msra.mxu0 0.0
        %813 = vmatpush.msra.mxu0 0.0
        %814 = vmatpush.msra.mxu0 0.0
        %815 = vmatpush.msra.mxu0 %v795
        %816 = vmatmul.f32.gmra.mxu0 %v798
        %v817 = vpop.f32.mrf.mxu0
        %v818 = vadd.f32 0.0, %v817
        %819 = vdwg.mxu0
        %820 = vrot.lane.b32.xlu0 %v559, 80
        %v821 = vpop.permute.xlu0 %820
        %822 = vrot.lane.b32.xlu0 %v586, 80
        %v823 = vpop.permute.xlu0 %822
        %v824 = vsel %vm616, %v821, 0
        %v826 = vsel %vm616, %v823, 0
        %828 = vmatpush.xpose.msra.mxu0 0.0
        %829 = vmatpush.xpose.msra.mxu0 0.0
        %830 = vmatpush.xpose.msra.mxu0 0.0
        %831 = vmatpush.xpose.msra.mxu0 0.0
        %832 = vmatpush.xpose.msra.mxu0 0.0
        %833 = vmatpush.xpose.msra.mxu0 0.0
        %834 = vmatpush.xpose.msra.mxu0 0.0
        %835 = vmatpush.xpose.msra.mxu0 0.0
        %836 = vmatpush.xpose.msra.mxu0 0.0
        %837 = vmatpush.xpose.msra.mxu0 0.0
        %838 = vmatpush.xpose.msra.mxu0 0.0
        %839 = vmatpush.xpose.msra.mxu0 0.0
        %840 = vmatpush.xpose.msra.mxu0 0.0
        %841 = vmatpush.xpose.msra.mxu0 0.0
        %842 = vmatpush.xpose.msra.mxu0 0.0
        %843 = vmatpush.xpose.msra.mxu0 %v826
        %844 = vmatmul.f32.gmra.mxu0 %v824
        %v845 = vpop.f32.mrf.mxu0
        %v846 = vadd.f32 0.0, %v845
        %847 = vdwg.mxu0
        %v848 = vmul.f32 %v846, 0.25
        %v849 = vsel %vm615, -1e+09, %v848
        %v850 = vsel %vm645, %v849, -inf
        %851 = vmax.xlane.f32.xlu0 %v850
        %v852 = vpop.xlane.xlu0 %851
        %v853 = vsub.f32 %v849, %v852
        %v854 = vmul.f32 %v853, 1.442695
        %v855 = vpow.pop %v854
        %v856 = vsel %vm645, %v855, 0.0
        %857 = vadd.xlane.f32.xlu0 %v856
        %v858 = vpop.xlane.xlu0 %857
        %v859 = vrcp.pop %v858
        %v860 = vmul.f32 %v855, %v859
        %s861 = scalar_lea.vmem %s528, 24 [#allocation11]
        %862 = vst.msk [vmem:[%s861] sm:$0xff] %vm645, %v860
        %863 = vrot.lane.b32.xlu0 %v613, 80
        %v864 = vpop.permute.xlu0 %863
        %v867 = vsel %vm645, %v860, 0
        %869 = vmatpush.msra.mxu0 0.0
        %870 = vmatpush.msra.mxu0 0.0
        %871 = vmatpush.msra.mxu0 0.0
        %872 = vmatpush.msra.mxu0 0.0
        %873 = vmatpush.msra.mxu0 0.0
        %874 = vmatpush.msra.mxu0 0.0
        %875 = vmatpush.msra.mxu0 0.0
        %876 = vmatpush.msra.mxu0 0.0
        %877 = vmatpush.msra.mxu0 0.0
        %878 = vmatpush.msra.mxu0 0.0
        %879 = vmatpush.msra.mxu0 0.0
        %880 = vmatpush.msra.mxu0 0.0
        %881 = vmatpush.msra.mxu0 0.0
        %882 = vmatpush.msra.mxu0 0.0
        %883 = vmatpush.msra.mxu0 0.0
        %884 = vmatpush.msra.mxu0 %v864
        %885 = vmatmul.f32.gmra.mxu0 %v867
        %v886 = vpop.f32.mrf.mxu0
        %v887 = vadd.f32 0.0, %v886
        %888 = vdwg.mxu0
        %890 = vrot.lane.b32.xlu0 %v749, 16
        %v891 = vpop.permute.xlu0 %890
        %894 = vrot.lane.b32.xlu0 %v818, 32
        %v895 = vpop.permute.xlu0 %894
        %898 = vrot.lane.b32.xlu0 %v887, 48
        %v899 = vpop.permute.xlu0 %898
        %v901 = vsel %vm616, %v679, %v891
        %v902 = vsel %vm537, %v901, %v895
        %vm903 = vcmask 392192
        %v904 = vsel %vm903, %v902, %v899
        %v905 = vld [vmem:[%s7] sm:$0xff]
        %v906 = vld [vmem:[%s7 + $0x8] sm:$0xff]
        %v907 = vld [vmem:[%s7 + $0x10] sm:$0xff]
        %v908 = vld [vmem:[%s7 + $0x18] sm:$0xff]
        %v909 = vld [vmem:[%s7 + $0x20] sm:$0xff]
        %v910 = vld [vmem:[%s7 + $0x28] sm:$0xff]
        %v911 = vld [vmem:[%s7 + $0x30] sm:$0xff]
        %v912 = vld [vmem:[%s7 + $0x38] sm:$0xff]
        %vm913 = vcmask 523264
        %v915 = vsel %vm913, %v904, 0
        %917 = vmatpush.msra.mxu0 0.0
        %918 = vmatpush.msra.mxu0 0.0
        %919 = vmatpush.msra.mxu0 0.0
        %920 = vmatpush.msra.mxu0 0.0
        %921 = vmatpush.msra.mxu0 0.0
        %922 = vmatpush.msra.mxu0 0.0
        %923 = vmatpush.msra.mxu0 0.0
        %924 = vmatpush.msra.mxu0 0.0
        %925 = vmatpush.msra.mxu0 %v912
        %926 = vmatpush.msra.mxu0 %v911
        %927 = vmatpush.msra.mxu0 %v910
        %928 = vmatpush.msra.mxu0 %v909
        %929 = vmatpush.msra.mxu0 %v908
        %930 = vmatpush.msra.mxu0 %v907
        %931 = vmatpush.msra.mxu0 %v906
        %932 = vmatpush.msra.mxu0 %v905
        %933 = vmatmul.f32.gmra.mxu0 %v915
        %v934 = vpop.f32.mrf.mxu0
        %v935 = vadd.f32 %v529, %v934
        %936 = vdwg.mxu0
        %v937 = vsel %vm537, %v935, 0.0
        %938 = vadd.xlane.f32.xlu0 %v937
        %v939 = vpop.xlane.xlu0 %938
        %v940 = vrcp.pop 32.0
        %v941 = vmul.f32 32.0, %v940
        %v942 = vsub.f32 1.0, %v941
        %v943 = vmul.f32 %v940, %v942
        %v944 = vadd.f32 %v940, %v943
        %vm945 = vweird.f32 %v940
        %v946 = vsel %vm945, %v940, %v944
        %v947 = vmul.f32 %v939, %v946
        %v948 = vsub.f32 %v935, %v947
        %v949 = vmul.f32 %v948, %v948
        %v950 = vsel %vm537, %v949, 0.0
        %951 = vadd.xlane.f32.xlu0 %v950
        %v952 = vpop.xlane.xlu0 %951
        %v953 = vmul.f32 %v952, %v946
        %v954 = vadd.f32 %v953, 1e-05
        %v955 = vrsqrt.pop %v954
        %v956 = vmul.f32 %v955, %v954
        %v957 = vmul.f32 %v956, %v955
        %v958 = vmul.f32 0.5, %v957
        %v959 = vsub.f32 1.5, %v958
        %v960 = vmul.f32 %v955, %v959
        %vm961 = vweird.f32 %v954
        %vm962 = vweird.f32 %v955
        %vm963 = vmor %vm961, %vm962
        %v964 = vsel %vm963, %v955, %v960
        %v965 = vmul.f32 %v948, %v964
        %v966 = vld [vmem:[%s8] sm:$0x1]
        %v968 = vperm.slane %v966, 0
        %v970 = vmul.f32 %v965, %v968
        %v971 = vld [vmem:[%s9] sm:$0x1]
        %v973 = vperm.slane %v971, 0
        %v975 = vadd.f32 %v970, %v973
        %976 = vst.msk [vmem:[%s521] sm:$0xff] %vm537, %v975
        %s977 = sand.u32 %s276, 1
        %s978 = scalar_lea.sflag [#allocation4], %s977
        %s979 = sand.u32 %s276, 1
        %s980 = smul.addr %s979, 8
        %s981 = scalar_lea.vmem [#allocation10], %s980
        %s982 = sand.u32 %s302, 1
        %s983 = scalar_lea.sflag [#allocation12], %s982
        %s984 = sand.u32 %s302, 1
        %s985 = smul.addr %s984, 32
        %s986 = scalar_lea.vmem [#allocation11], %s985
        // Predicated region
        $region77: #{tpu_custom_call.1} parent=59 // pred_check
          %p987 = pneg %p286
        $region78: #{tpu_custom_call.1} parent=59 // pred_check_branch
          %989 = sbr.rel (%p987) target = $region80
        $region79: #{tpu_custom_call.1} parent=59 // pred_region
          %991 = vsyncadd %s978, 0
          %s992 = smul.addr %s38, 8
          %s993 = scalar_lea.hbm %s10, %s992
          %s995 = sshll.u32 %s981, 4
          %s996 = int_to_ptr.vmem [resolvable:$true] %s995
          %s997 = sshll.u32 %s993, 4
          %s998 = int_to_ptr.hbm [resolvable:$true] %s997
          %1000 = dma.vmem_to_hbm [thread:$0]  %s996, 128, %s998, %s978
        $region80: #{tpu_custom_call.1} parent=59 // pred_fallthru
          _
        // Predicated region
        $region81: #{tpu_custom_call.1} parent=59 // pred_check
          %p1001 = pneg %p312
        $region82: #{tpu_custom_call.1} parent=59 // pred_check_branch
          %1003 = sbr.rel (%p1001) target = $region84
        $region83: #{tpu_custom_call.1} parent=59 // pred_region
          %1005 = vsyncadd %s983, 0
          %s1006 = smul.addr %s38, 4
          %s1007 = smul.addr %s1006, 8
          %s1008 = scalar_lea.hbm %s11, %s1007
          %s1009 = sshll.u32 %s986, 4
          %s1010 = int_to_ptr.vmem [resolvable:$true] %s1009
          %s1011 = sshll.u32 %s1008, 4
          %s1012 = int_to_ptr.hbm [resolvable:$true] %s1011
          %1017 = dma.vmem_to_hbm [thread:$0]  %s1010, 512, %s1012, %s983, 128, 128, 8
        $region84: #{tpu_custom_call.1} parent=59 // pred_fallthru
          _
      $region60: #{tpu_custom_call.1} parent=5 // pred_fallthru
        _
      %p1018 = scmp.le.s32.totalorder 2, %s33
      // Predicated region
      $region85: #{tpu_custom_call.1} parent=5 // pred_check
        %p1019 = pneg %p1018
      $region86: #{tpu_custom_call.1} parent=5 // pred_check_branch
        %1021 = sbr.rel (%p1019) target = $region88
      $region87: #{tpu_custom_call.1} parent=5 // pred_region
        %s1022 = ssub.s32 %s33, 2
        // Predicated region
        $region89: #{tpu_custom_call.1} parent=87 // pred_check
          %p1023 = pneg %p292
        $region90: #{tpu_custom_call.1} parent=87 // pred_check_branch
          %1025 = sbr.rel (%p1023) target = $region92
        $region91: #{tpu_custom_call.1} parent=87 // pred_region
          %s1026 = sand.u32 %s277, 1
          %s1027 = scalar_lea.sflag [#allocation4], %s1026
          %s1028 = sand.u32 %s277, 1
          %s1029 = smul.addr %s1028, 8
          %s1030 = scalar_lea.vmem [#allocation10], %s1029
          %1032 = dma.done %s1027, 128
        $region92: #{tpu_custom_call.1} parent=87 // pred_fallthru
          _
        // Predicated region
        $region93: #{tpu_custom_call.1} parent=87 // pred_check
          %p1033 = pneg %p318
        $region94: #{tpu_custom_call.1} parent=87 // pred_check_branch
          %1035 = sbr.rel (%p1033) target = $region96
        $region95: #{tpu_custom_call.1} parent=87 // pred_region
          %s1036 = sand.u32 %s303, 1
          %s1037 = scalar_lea.sflag [#allocation12], %s1036
          %s1038 = sand.u32 %s303, 1
          %s1039 = smul.addr %s1038, 32
          %s1040 = scalar_lea.vmem [#allocation11], %s1039
          %1042 = dma.done %s1037, 512
        $region96: #{tpu_custom_call.1} parent=87 // pred_fallthru
          _
      $region88: #{tpu_custom_call.1} parent=5 // pred_fallthru
        _
    $region6: #{tpu_custom_call.1} parent=1 // loop_footer
      %s37 = sadd.s32 1, %s33
    $region7: #{tpu_custom_call.1} parent=1 // loop_footer_branch
      %32 = sbr.rel target = $region3
    $region8: #{tpu_custom_call.1} parent=1 // loop_exit
      _
    %1043 = vsyncpa [#allocation3], 1
    %s1044 = scalar_lea.sflag [#allocation3], 1
    %1045 = vsyncpa %s1044, 1
    %1046 = vsyncpa [#allocation6], 1
    %s1047 = scalar_lea.sflag [#allocation6], 1
    %1048 = vsyncpa %s1047, 1
    %1049 = vsyncpa [#allocation9], 1
    %s1050 = scalar_lea.sflag [#allocation9], 1
    %1051 = vsyncpa %s1050, 1
    %1052 = vsyncpa [#allocation4], 1
    %s1053 = scalar_lea.sflag [#allocation4], 1
    %1054 = vsyncpa %s1053, 1
    %1055 = vsyncpa [#allocation12], 1
    %s1056 = scalar_lea.sflag [#allocation12], 1
    %1057 = vsyncpa %s1056, 1

</llo_original>
